<compile_context>
chip_gen: v5e
topology: v5e:2x2
jax: 0.10.0
libtpu: 0.0.40
codegen_flags: <defaults>
</compile_context>

<pallas_src>
import functools

import jax
import jax.numpy as jnp
from jax.experimental import pallas as pl
from jax.experimental.pallas import tpu as pltpu


def layernorm_kernel(x_ref, gamma_ref, beta_ref, o_ref, *, eps, inv_nm1, approx):
    x = x_ref[...].astype(jnp.float32)          # (tile_rows, d_model)
    gamma = gamma_ref[...].astype(jnp.float32)  # (1, d_model)
    beta = beta_ref[...].astype(jnp.float32)    # (1, d_model)

    mean = jnp.mean(x, axis=-1, keepdims=True)
    centered = x - mean
    # Unbiased variance (divide by N-1), eps added to std — matches the
    # PyTorch module (x.std(-1) default is unbiased; eps is added to std).
    # Two-pass form kept for numerical robustness (no sum_sq - N*mean^2).
    var = jnp.sum(centered * centered, axis=-1, keepdims=True) * inv_nm1
    # Narrow (tile_rows, 1) column; pl.reciprocal uses the otherwise-idle EUP.
    inv = pl.reciprocal(jnp.sqrt(var) + eps, approx=approx)
    o_ref[...] = (centered * inv * gamma + beta).astype(o_ref.dtype)


def _round_up(v, m):
    return ((v + m - 1) // m) * m


def _cdiv(a, b):
    return -(-a // b)


def _sublane_multiple(dtype):
    # Sub-32-bit dtypes pack rows along sublanes: f32 -> 8, bf16 -> 16, i8 -> 32.
    itemsize = jnp.dtype(dtype).itemsize
    return max(8, 32 // max(itemsize, 1))


def _vmem_limit_bytes():
    """Scoped-VMEM limit: raise v5e's 16 MiB default, never exceed 32 MiB.

    32 MiB is half of v7x's per-TC physical VMEM even if get_tpu_info reports
    chip-level capacity, and leaves headroom for Mosaic internal scratch.
    """
    try:
        cap = int(pltpu.get_tpu_info().vmem_capacity_bytes)
    except Exception:
        cap = 64 * 1024 * 1024
    return min(cap // 2, 32 * 1024 * 1024)


def _choose_tile_rows(rows, d_model, dtype):
    sub = _sublane_multiple(dtype)
    row_bytes = max(d_model * jnp.dtype(dtype).itemsize, 1)

    # ~2 MiB per x/out block already amortizes the ~0.35 us per-step overhead
    # and saturates HBM; bigger blocks only balloon double-buffer + f32 temps.
    target_block_bytes = 2 * 1024 * 1024
    tile = max(target_block_bytes // row_bytes, 1)
    tile = max(tile, 256)  # per-step overhead floor for small d_model
    # Hard cap the block (and its in-kernel f32 temporaries) at ~4 MiB.
    tile = min(tile, max(sub, (4 * 1024 * 1024) // row_bytes))
    # Keep >= ~8 grid blocks when rows allow, so the "parallel" axis shards
    # across TensorCores (v7x megacore) and the pipeline has steps to overlap.
    tile = min(tile, _round_up(_cdiv(rows, 8), sub))

    tile = max(sub, (tile // sub) * sub)        # dtype-aware sublane rounding
    rows_up = _round_up(rows, sub)              # don't exceed what's needed
    return max(sub, min(tile, rows_up))


def layer_norm(x, gamma, beta, eps=1e-6, tile_rows=None, approx_reciprocal=False):
    # x: (..., d_model); gamma/beta: (d_model,)
    orig_shape = x.shape
    d_model = orig_shape[-1]
    assert d_model > 1, "LayerNorm with unbiased std requires d_model > 1"

    x2 = x.reshape(-1, d_model)
    rows = x2.shape[0]

    if tile_rows is None:
        tile_rows = _choose_tile_rows(rows, d_model, x.dtype)
    vmem_limit = _vmem_limit_bytes()

    grid = (_cdiv(rows, tile_rows),)  # partial last block is masked by Pallas

    gamma2 = gamma.reshape(1, d_model)
    beta2 = beta.reshape(1, d_model)

    kernel = functools.partial(
        layernorm_kernel,
        eps=float(eps),
        inv_nm1=1.0 / float(d_model - 1),
        approx=bool(approx_reciprocal),
    )

    out = pl.pallas_call(
        kernel,
        out_shape=jax.ShapeDtypeStruct((rows, d_model), x.dtype),
        grid_spec=pltpu.PrefetchScalarGridSpec(
            num_scalar_prefetch=0,
            grid=grid,
            in_specs=[
                pl.BlockSpec((tile_rows, d_model), lambda i: (i, 0)),
                pl.BlockSpec((1, d_model), lambda i: (0, 0)),
                pl.BlockSpec((1, d_model), lambda i: (0, 0)),
            ],
            out_specs=pl.BlockSpec((tile_rows, d_model), lambda i: (i, 0)),
        ),
        compiler_params=pltpu.CompilerParams(
            dimension_semantics=("parallel",),
            vmem_limit_bytes=int(vmem_limit),
        ),
    )(x2, gamma2, beta2)

    return out.reshape(orig_shape)


if __name__ == "__main__":
    key = jax.random.PRNGKey(0)
    batch, seq, d_model = 2, 8, 32
    # NOTE: small functional-test shape; production d_model should be a
    # multiple of 128 for lane-dense (unmasked) output stores.
    x = jax.random.normal(key, (batch, seq, d_model), dtype=jnp.float32)

    # Deterministic parameter init matching nn.Parameter(torch.ones/zeros(d_model)).
    gamma = jnp.ones((d_model,), dtype=jnp.float32)
    beta = jnp.zeros((d_model,), dtype=jnp.float32)

    out = layer_norm(x, gamma, beta, eps=1e-6)
    jax.block_until_ready(out)

    # Pure-JAX reference (unbiased std, eps added to std) for sanity check.
    mean = jnp.mean(x, axis=-1, keepdims=True)
    std = jnp.sqrt(jnp.sum((x - mean) ** 2, axis=-1, keepdims=True) / (d_model - 1))
    ref = gamma * (x - mean) / (std + 1e-6) + beta
    assert jnp.allclose(out, ref, atol=1e-5, rtol=1e-5)

    print("KERNEL_OK")
</pallas_src>

<mosaic_0001>
module attributes {stable_mosaic.version = 11 : i64} {
  func.func @layernorm_kernel(%arg0: i32, %arg1: memref<8x32xf32, #tpu.memory_space<vmem>>, %arg2: memref<1x32xf32, #tpu.memory_space<vmem>>, %arg3: memref<1x32xf32, #tpu.memory_space<vmem>>, %arg4: memref<8x32xf32, #tpu.memory_space<vmem>>) attributes {dimension_semantics = [#tpu.dimension_semantics<parallel>], iteration_bounds = array<i64: 2>, scalar_prefetch = 0 : i64, scratch_operands = 0 : i64, tpu.core_type = #tpu.core_type<tc>, window_params = [{transform_indices = @transform_0, window_bounds = array<i64: 8, 32>}, {pipeline_mode = #tpu.pipeline_mode<synchronous>, transform_indices = @transform_1, window_bounds = array<i64: 1, 32>}, {pipeline_mode = #tpu.pipeline_mode<synchronous>, transform_indices = @transform_2, window_bounds = array<i64: 1, 32>}, {transform_indices = @transform_3, window_bounds = array<i64: 8, 32>}]} {
    %c0 = arith.constant 0 : index
    %c0_0 = arith.constant 0 : index
    %0 = vector.load %arg1[%c0, %c0_0] : memref<8x32xf32, #tpu.memory_space<vmem>>, vector<8x32xf32>
    %c0_1 = arith.constant 0 : index
    %c0_2 = arith.constant 0 : index
    %1 = vector.load %arg2[%c0_1, %c0_2] : memref<1x32xf32, #tpu.memory_space<vmem>>, vector<1x32xf32>
    %c0_3 = arith.constant 0 : index
    %c0_4 = arith.constant 0 : index
    %2 = vector.load %arg3[%c0_3, %c0_4] : memref<1x32xf32, #tpu.memory_space<vmem>>, vector<1x32xf32>
    %cst = arith.constant dense<0.000000e+00> : vector<8xf32>
    %3 = vector.multi_reduction <add>, %0, %cst [1] : vector<8x32xf32> to vector<8xf32>
    %4 = vector.shape_cast %3 : vector<8xf32> to vector<8x1xf32>
    %cst_5 = arith.constant 3.200000e+01 : f32
    %5 = vector.broadcast %cst_5 : f32 to vector<8x1xf32>
    %6 = arith.divf %4, %5 : vector<8x1xf32>
    %7 = vector.broadcast %6 : vector<8x1xf32> to vector<8x32xf32>
    %8 = arith.subf %0, %7 : vector<8x32xf32>
    %9 = arith.mulf %8, %8 : vector<8x32xf32>
    %cst_6 = arith.constant dense<0.000000e+00> : vector<8xf32>
    %10 = vector.multi_reduction <add>, %9, %cst_6 [1] : vector<8x32xf32> to vector<8xf32>
    %11 = vector.shape_cast %10 : vector<8xf32> to vector<8x1xf32>
    %cst_7 = arith.constant 0.0322580636 : f32
    %12 = vector.broadcast %cst_7 : f32 to vector<8x1xf32>
    %13 = arith.mulf %11, %12 : vector<8x1xf32>
    %14 = math.sqrt %13 : vector<8x1xf32>
    %cst_8 = arith.constant 9.99999997E-7 : f32
    %15 = vector.broadcast %cst_8 : f32 to vector<8x1xf32>
    %16 = arith.addf %14, %15 : vector<8x1xf32>
    %17 = tpu.reciprocal %16 : vector<8x1xf32> -> vector<8x1xf32>
    %18 = vector.broadcast %17 : vector<8x1xf32> to vector<8x32xf32>
    %19 = arith.mulf %8, %18 : vector<8x32xf32>
    %20 = vector.broadcast %1 : vector<1x32xf32> to vector<8x32xf32>
    %21 = arith.mulf %19, %20 : vector<8x32xf32>
    %22 = vector.broadcast %2 : vector<1x32xf32> to vector<8x32xf32>
    %23 = arith.addf %21, %22 : vector<8x32xf32>
    %c0_9 = arith.constant 0 : index
    %c0_10 = arith.constant 0 : index
    %24 = vector.load %arg4[%c0_9, %c0_10] : memref<8x32xf32, #tpu.memory_space<vmem>>, vector<8x32xf32>
    tpu.vector_store %arg4[%c0_9, %c0_10], %23 {strides = array<i32>} : memref<8x32xf32, #tpu.memory_space<vmem>>, vector<8x32xf32>,
    return
  }
  func.func @transform_0(%arg0: i32) -> (i32, i32) {
    %c0_i32 = arith.constant 0 : i32
    %c0_i32_0 = arith.constant 0 : i32
    return %arg0, %c0_i32 : i32, i32
  }
  func.func @transform_1(%arg0: i32) -> (i32, i32) {
    %c0_i32 = arith.constant 0 : i32
    %c0_i32_0 = arith.constant 0 : i32
    %c0_i32_1 = arith.constant 0 : i32
    return %c0_i32, %c0_i32_0 : i32, i32
  }
  func.func @transform_2(%arg0: i32) -> (i32, i32) {
    %c0_i32 = arith.constant 0 : i32
    %c0_i32_0 = arith.constant 0 : i32
    %c0_i32_1 = arith.constant 0 : i32
    return %c0_i32, %c0_i32_0 : i32, i32
  }
  func.func @transform_3(%arg0: i32) -> (i32, i32) {
    %c0_i32 = arith.constant 0 : i32
    %c0_i32_0 = arith.constant 0 : i32
    return %arg0, %c0_i32 : i32, i32
  }
}

</mosaic_0001>

<llo_original>
// kernel: tpu_custom_call.1
$region0: #{tpu_custom_call.1}
  #allocation0 [shape = 'u32[]', space=smem, size = 0x4, offset = 0x4, fixed_abs, tag = 'smem constant byte address 0x4 - core index']
  #allocation1 [shape = 'u32[72,128]{1,0:T(1,128)}', space=vmem, size = 0x9000, scoped, tag = 'internal scratch']
  %s0 = inlined_call_operand.hbm [shape: f32[16,32], index: 0, kind: input, shape index: {}]
  %s1 = inlined_call_operand.hbm [shape: f32[1,32], index: 1, kind: input, shape index: {}]
  %s2 = inlined_call_operand.vmem [shape: f32[1,32], index: 2, kind: input, shape index: {}]
  %s3 = inlined_call_operand.hbm [shape: f32[16,32], index: 3, kind: output, shape index: {}]
  %s4 = sld [smem:[#allocation0]]
  $region53: #{tpu_custom_call.1} parent=0
    _
  %s6 = ssub.s32 1, %s4
  %s7 = scalar_select 0, %s6, %s4
  $region1: #{tpu_custom_call.1} parent=0
    #allocation2 [shape = 'u8[8192]{0}', space=vmem, size = 0x2000, scoped, tag = 'input window, operand 0']
    #allocation3 [shape = 's32[2]{0}', space=sflag, size = 0x8, scoped, tag = 'scoped memory for tpu_custom_call.1']
    #allocation4 [shape = 's32[2]{0}', space=sflag, size = 0x8, scoped, tag = 'scoped memory for tpu_custom_call.1']
    #allocation5 [shape = 'u8[512]{0}', space=vmem, size = 0x400, scoped, tag = 'input window, operand 1, single buffered']
    #allocation6 [shape = 's32[1]{0}', space=sflag, size = 0x4, scoped, tag = 'scoped memory for tpu_custom_call.1']
    #allocation7 [shape = 'u8[8192]{0}', space=vmem, size = 0x2000, scoped, tag = 'output window, operand 0']
    %8 = vsyncpa [#allocation3], 0
    %s9 = scalar_lea.sflag [#allocation3], 1
    %10 = vsyncpa %s9, 0
    %11 = vsyncpa [#allocation6], 0
    %12 = vsyncpa [#allocation4], 0
    %s13 = scalar_lea.sflag [#allocation4], 1
    %14 = vsyncpa %s13, 0
    loop: start=0, step=1, limit=4
    $region2: #{tpu_custom_call.1} parent=1 // loop_pre_header
      _
    $region3: #{tpu_custom_call.1} parent=1 // loop_header
      %s16 = sphi 0, %s20
      %p17 = scmp.ge.s32.totalorder %s16, 4
      %s26 = sphi 0, %s28
      %s29 = sphi 0, %s26
      %s30 = sphi 0, %s29
      %s46 = sphi 0, %s30
      %s50 = sphi 0, %s50
      %s52 = sphi 0, %s50
      %s53 = sphi 0, %s52
      %s67 = sphi 0, %s53
      %s71 = sphi 0, %s71
      %s73 = sphi 0, %s71
      %s74 = sphi 0, %s73
      %s88 = sphi 0, %s74
      %s94 = sphi 0, %s96
      %s97 = sphi 0, %s94
      %s98 = sphi 0, %s97
      %s114 = sphi 0, %s98
    $region4: #{tpu_custom_call.1} parent=1 // loop_header_branch
      %19 = sbr.rel (%p17) target = $region8
    $region5: #{tpu_custom_call.1} parent=1 // loop_body
      %s21 = ssub.s32 %s16, 1
      %s22 = ssub.s32 %s16, 2
      %s23 = sadd.s32 %s16, 1
      %s24 = ssub.s32 %s16, %s23
      %p25 = scmp.eq.s32.totalorder %s24, 0
      %s27 = sadd.s32 %s26, 1
      %s28 = scalar_select %p25, %s26, %s27
      %p31 = pneg %p25
      %p32 = scmp.eq.s32.totalorder %s16, 1
      %p33 = por %p31, %p32
      %p34 = scmp.ne.s32.totalorder %s26, %s29
      %p35 = scmp.eq.s32.totalorder %s16, 0
      %p36 = por %p34, %p35
      %p37 = scmp.ne.s32.totalorder %s26, %s29
      %p38 = scmp.eq.s32.totalorder %s21, 1
      %p39 = por %p37, %p38
      %p40 = scmp.ne.s32.totalorder %s29, %s30
      %p41 = scmp.eq.s32.totalorder %s21, 0
      %p42 = por %p40, %p41
      %p43 = scmp.ne.s32.totalorder %s29, %s30
      %p44 = scmp.eq.s32.totalorder %s22, 1
      %p45 = por %p43, %p44
      %p47 = scmp.ne.s32.totalorder %s30, %s46
      %p48 = scmp.eq.s32.totalorder %s22, 0
      %p49 = por %p47, %p48
      %s51 = sadd.s32 %s50, 1
      %p54 = scmp.eq.s32.totalorder %s16, 1
      %p55 = scmp.ne.s32.totalorder %s50, %s52
      %p56 = scmp.eq.s32.totalorder %s16, 0
      %p57 = por %p55, %p56
      %p58 = scmp.ne.s32.totalorder %s50, %s52
      %p59 = scmp.eq.s32.totalorder %s21, 1
      %p60 = por %p58, %p59
      %p61 = scmp.ne.s32.totalorder %s52, %s53
      %p62 = scmp.eq.s32.totalorder %s21, 0
      %p63 = por %p61, %p62
      %p64 = scmp.ne.s32.totalorder %s52, %s53
      %p65 = scmp.eq.s32.totalorder %s22, 1
      %p66 = por %p64, %p65
      %p68 = scmp.ne.s32.totalorder %s53, %s67
      %p69 = scmp.eq.s32.totalorder %s22, 0
      %p70 = por %p68, %p69
      %s72 = sadd.s32 %s71, 1
      %p75 = scmp.eq.s32.totalorder %s16, 1
      %p76 = scmp.ne.s32.totalorder %s71, %s73
      %p77 = scmp.eq.s32.totalorder %s16, 0
      %p78 = por %p76, %p77
      %p79 = scmp.ne.s32.totalorder %s71, %s73
      %p80 = scmp.eq.s32.totalorder %s21, 1
      %p81 = por %p79, %p80
      %p82 = scmp.ne.s32.totalorder %s73, %s74
      %p83 = scmp.eq.s32.totalorder %s21, 0
      %p84 = por %p82, %p83
      %p85 = scmp.ne.s32.totalorder %s73, %s74
      %p86 = scmp.eq.s32.totalorder %s22, 1
      %p87 = por %p85, %p86
      %p89 = scmp.ne.s32.totalorder %s74, %s88
      %p90 = scmp.eq.s32.totalorder %s22, 0
      %p91 = por %p89, %p90
      %s92 = ssub.s32 %s16, %s23
      %p93 = scmp.eq.s32.totalorder %s92, 0
      %s95 = sadd.s32 %s94, 1
      %s96 = scalar_select %p93, %s94, %s95
      %p99 = pneg %p93
      %p100 = scmp.eq.s32.totalorder %s16, 1
      %p101 = por %p99, %p100
      %p102 = scmp.ne.s32.totalorder %s94, %s97
      %p103 = scmp.eq.s32.totalorder %s16, 0
      %p104 = por %p102, %p103
      %p105 = scmp.ne.s32.totalorder %s94, %s97
      %p106 = scmp.eq.s32.totalorder %s21, 1
      %p107 = por %p105, %p106
      %p108 = scmp.ne.s32.totalorder %s97, %s98
      %p109 = scmp.eq.s32.totalorder %s21, 0
      %p110 = por %p108, %p109
      %p111 = scmp.ne.s32.totalorder %s97, %s98
      %p112 = scmp.eq.s32.totalorder %s22, 1
      %p113 = por %p111, %p112
      %p115 = scmp.ne.s32.totalorder %s98, %s114
      %p116 = scmp.eq.s32.totalorder %s22, 0
      %p117 = por %p115, %p116
      %p118 = scmp.le.s32.totalorder 1, %s16
      %p119 = scmp.lt.s32.totalorder %s16, 3
      %p120 = pnand %p118, %p119
      %p121 = pneg %p120
      // Predicated region
      $region9: #{tpu_custom_call.1} parent=5 // pred_check
        _
      $region10: #{tpu_custom_call.1} parent=5 // pred_check_branch
        %123 = sbr.rel (%p120) target = $region12
      $region11: #{tpu_custom_call.1} parent=5 // pred_region
        %s124 = ssub.s32 %s16, 1
        // Predicated region
        $region13: #{tpu_custom_call.1} parent=11 // pred_check
          %p125 = pneg %p63
        $region14: #{tpu_custom_call.1} parent=11 // pred_check_branch
          %127 = sbr.rel (%p125) target = $region16
        $region15: #{tpu_custom_call.1} parent=11 // pred_region
          %129 = vsyncadd [#allocation6], 0
          %s131 = sshll.u32 %s1, 4
          %s132 = int_to_ptr.hbm [resolvable:$true] %s131
          %s133 = sshll.u32 [#allocation5], 4
          %s134 = int_to_ptr.vmem [resolvable:$true] %s133
          %136 = dma.hbm_to_vmem [thread:$0]  %s132, 16, %s134, [#allocation6]
        $region16: #{tpu_custom_call.1} parent=11 // pred_fallthru
          _
        // Predicated region
        $region17: #{tpu_custom_call.1} parent=11 // pred_check
          %p137 = pneg %p84
        $region18: #{tpu_custom_call.1} parent=11 // pred_check_branch
          %139 = sbr.rel (%p137) target = $region20
        $region19: #{tpu_custom_call.1} parent=11 // pred_region
          _
        $region20: #{tpu_custom_call.1} parent=11 // pred_fallthru
          _
      $region12: #{tpu_custom_call.1} parent=5 // pred_fallthru
        _
      %p140 = scmp.lt.s32.totalorder %s16, 2
      // Predicated region
      $region21: #{tpu_custom_call.1} parent=5 // pred_check
        %p141 = pneg %p140
      $region22: #{tpu_custom_call.1} parent=5 // pred_check_branch
        %143 = sbr.rel (%p141) target = $region24
      $region23: #{tpu_custom_call.1} parent=5 // pred_region
        // Predicated region
        $region25: #{tpu_custom_call.1} parent=23 // pred_check
          %p144 = pneg %p36
        $region26: #{tpu_custom_call.1} parent=23 // pred_check_branch
          %146 = sbr.rel (%p144) target = $region28
        $region27: #{tpu_custom_call.1} parent=23 // pred_region
          %s147 = sand.u32 %s26, 1
          %s148 = scalar_lea.sflag [#allocation3], %s147
          %s149 = sand.u32 %s26, 1
          %s150 = smul.addr %s149, 8
          %s151 = scalar_lea.vmem [#allocation2], %s150
          %153 = vsyncadd %s148, 0
          %s154 = smul.addr %s16, 8
          %s155 = scalar_lea.hbm %s0, %s154
          %s157 = sshll.u32 %s155, 4
          %s158 = int_to_ptr.hbm [resolvable:$true] %s157
          %s159 = sshll.u32 %s151, 4
          %s160 = int_to_ptr.vmem [resolvable:$true] %s159
          %162 = dma.hbm_to_vmem [thread:$0]  %s158, 128, %s160, %s148
        $region28: #{tpu_custom_call.1} parent=23 // pred_fallthru
          _
      $region24: #{tpu_custom_call.1} parent=5 // pred_fallthru
        _
      %p163 = scmp.le.s32.totalorder 1, %s16
      %p164 = scmp.lt.s32.totalorder %s16, 3
      %p165 = pnand %p163, %p164
      %p166 = pneg %p165
      // Predicated region
      $region29: #{tpu_custom_call.1} parent=5 // pred_check
        _
      $region30: #{tpu_custom_call.1} parent=5 // pred_check_branch
        %168 = sbr.rel (%p165) target = $region32
      $region31: #{tpu_custom_call.1} parent=5 // pred_region
        %s169 = ssub.s32 %s16, 1
        %s170 = sand.u32 %s29, 1
        %s171 = scalar_lea.sflag [#allocation3], %s170
        %s172 = sand.u32 %s29, 1
        %s173 = smul.addr %s172, 8
        %s174 = scalar_lea.vmem [#allocation2], %s173
        // Predicated region
        $region33: #{tpu_custom_call.1} parent=31 // pred_check
          %p175 = pneg %p42
        $region34: #{tpu_custom_call.1} parent=31 // pred_check_branch
          %177 = sbr.rel (%p175) target = $region36
        $region35: #{tpu_custom_call.1} parent=31 // pred_region
          %179 = dma.done %s171, 128
        $region36: #{tpu_custom_call.1} parent=31 // pred_fallthru
          _
        // Predicated region
        $region37: #{tpu_custom_call.1} parent=31 // pred_check
          %p180 = pneg %p63
        $region38: #{tpu_custom_call.1} parent=31 // pred_check_branch
          %182 = sbr.rel (%p180) target = $region40
        $region39: #{tpu_custom_call.1} parent=31 // pred_region
          %184 = dma.done [#allocation6], 16
        $region40: #{tpu_custom_call.1} parent=31 // pred_fallthru
          _
        %s185 = sand.u32 %s29, 1
        %s186 = scalar_lea.sflag [#allocation3], %s185
        %s187 = sand.u32 %s29, 1
        %s188 = smul.addr %s187, 8
        %s189 = scalar_lea.vmem [#allocation2], %s188
        %p190 = pneg %p42
        %p191 = pneg %p39
        %p192 = pneg %p63
        %p193 = pneg %p60
        %p194 = pneg %p84
        %p195 = pneg %p81
        %p196 = pneg %p110
        %p197 = pneg %p107
        %s198 = sand.u32 %s97, 1
        %s199 = scalar_lea.sflag [#allocation4], %s198
        %s200 = sand.u32 %s97, 1
        %s201 = smul.addr %s200, 8
        %s202 = scalar_lea.vmem [#allocation7], %s201
        %v203 = vld [vmem:[%s174] sm:$0xff]
        %v204 = vld [vmem:[#allocation5] sm:$0x1]
        %v205 = vld [vmem:[%s2] sm:$0x1]
        %vm206 = vcmask 261120
        %v207 = vsel %vm206, %v203, 0.0
        %208 = vadd.xlane.f32.xlu0 %v207
        %v209 = vpop.xlane.xlu0 %208
        %v210 = vrcp.pop 32.0
        %v211 = vmul.f32 32.0, %v210
        %v212 = vsub.f32 1.0, %v211
        %v213 = vmul.f32 %v210, %v212
        %v214 = vadd.f32 %v210, %v213
        %vm215 = vweird.f32 %v210
        %v216 = vsel %vm215, %v210, %v214
        %v217 = vmul.f32 %v209, %v216
        %v218 = vsub.f32 %v203, %v217
        %v219 = vmul.f32 %v218, %v218
        %v220 = vsel %vm206, %v219, 0.0
        %221 = vadd.xlane.f32.xlu0 %v220
        %v222 = vpop.xlane.xlu0 %221
        %v223 = vmul.f32 %v222, 0.032258064
        %v224 = vrsqrt.pop %v223
        %v225 = vmul.f32 %v224, %v223
        %v226 = vmul.f32 %v225, %v224
        %v227 = vmul.f32 0.5, %v226
        %v228 = vsub.f32 1.5, %v227
        %v229 = vmul.f32 %v224, %v228
        %v230 = vmul.f32 %v223, %v229
        %vm231 = vcmp.eq.f32.partialorder %v223, inf
        %v232 = vsel %vm231, %v223, %v230
        %vm233 = vcmp.eq.f32.partialorder %v223, 0.0
        %v234 = vand.u32 %v223, 2147483648
        %v235 = vsel %vm233, %v234, %v232
        %v236 = vadd.f32 %v235, 1e-06
        %v237 = vrcp.pop %v236
        %v238 = vmul.f32 %v236, %v237
        %v239 = vsub.f32 1.0, %v238
        %v240 = vmul.f32 %v237, %v239
        %v241 = vadd.f32 %v237, %v240
        %vm242 = vweird.f32 %v236
        %vm243 = vweird.f32 %v237
        %vm244 = vmor %vm242, %vm243
        %v245 = vsel %vm244, %v237, %v241
        %v246 = vand.u32 2147483647, %v236
        %vm247 = vcmp.eq.f32.partialorder %v246, 8.507059e+37
        %v248 = vand.u32 %v236, 2147483648
        %v249 = vor.u32 1.1754944e-38, %v248
        %v250 = vsel %vm247, %v249, %v245
        %v251 = vmul.f32 %v218, %v250
        %v253 = vperm.slane %v204, 0
        %v255 = vmul.f32 %v251, %v253
        %v257 = vperm.slane %v205, 0
        %v259 = vadd.f32 %v255, %v257
        %260 = vst.msk [vmem:[%s202] sm:$0xff] %vm206, %v259
        %s261 = sand.u32 %s97, 1
        %s262 = scalar_lea.sflag [#allocation4], %s261
        %s263 = sand.u32 %s97, 1
        %s264 = smul.addr %s263, 8
        %s265 = scalar_lea.vmem [#allocation7], %s264
        // Predicated region
        $region41: #{tpu_custom_call.1} parent=31 // pred_check
          %p266 = pneg %p107
        $region42: #{tpu_custom_call.1} parent=31 // pred_check_branch
          %268 = sbr.rel (%p266) target = $region44
        $region43: #{tpu_custom_call.1} parent=31 // pred_region
          %270 = vsyncadd %s262, 0
          %s271 = smul.addr %s21, 8
          %s272 = scalar_lea.hbm %s3, %s271
          %s274 = sshll.u32 %s265, 4
          %s275 = int_to_ptr.vmem [resolvable:$true] %s274
          %s276 = sshll.u32 %s272, 4
          %s277 = int_to_ptr.hbm [resolvable:$true] %s276
          %279 = dma.vmem_to_hbm [thread:$0]  %s275, 128, %s277, %s262
        $region44: #{tpu_custom_call.1} parent=31 // pred_fallthru
          _
      $region32: #{tpu_custom_call.1} parent=5 // pred_fallthru
        _
      %p280 = scmp.le.s32.totalorder 2, %s16
      // Predicated region
      $region45: #{tpu_custom_call.1} parent=5 // pred_check
        %p281 = pneg %p280
      $region46: #{tpu_custom_call.1} parent=5 // pred_check_branch
        %283 = sbr.rel (%p281) target = $region48
      $region47: #{tpu_custom_call.1} parent=5 // pred_region
        %s284 = ssub.s32 %s16, 2
        // Predicated region
        $region49: #{tpu_custom_call.1} parent=47 // pred_check
          %p285 = pneg %p113
        $region50: #{tpu_custom_call.1} parent=47 // pred_check_branch
          %287 = sbr.rel (%p285) target = $region52
        $region51: #{tpu_custom_call.1} parent=47 // pred_region
          %s288 = sand.u32 %s98, 1
          %s289 = scalar_lea.sflag [#allocation4], %s288
          %s290 = sand.u32 %s98, 1
          %s291 = smul.addr %s290, 8
          %s292 = scalar_lea.vmem [#allocation7], %s291
          %294 = dma.done %s289, 128
        $region52: #{tpu_custom_call.1} parent=47 // pred_fallthru
          _
      $region48: #{tpu_custom_call.1} parent=5 // pred_fallthru
        _
    $region6: #{tpu_custom_call.1} parent=1 // loop_footer
      %s20 = sadd.s32 1, %s16
    $region7: #{tpu_custom_call.1} parent=1 // loop_footer_branch
      %15 = sbr.rel target = $region3
    $region8: #{tpu_custom_call.1} parent=1 // loop_exit
      _
    %295 = vsyncpa [#allocation3], 1
    %s296 = scalar_lea.sflag [#allocation3], 1
    %297 = vsyncpa %s296, 1
    %298 = vsyncpa [#allocation6], 1
    %299 = vsyncpa [#allocation4], 1
    %s300 = scalar_lea.sflag [#allocation4], 1
    %301 = vsyncpa %s300, 1

</llo_original>
